<compile_context>
chip_gen: v6e
topology: v6e:2x2x1
jax: 0.10.0
libtpu: 0.0.40
codegen_flags: <defaults>
</compile_context>

<pallas_src>
import functools

import jax
import jax.numpy as jnp
from jax.experimental import pallas as pl
from jax.experimental.pallas import tpu as pltpu

HIDDEN = 512          # discriminator hidden width
W3_PAD = 128          # layer-3 weight column zero-padded to one full lane group / MXU pass
LEAKY_SLOPE = 0.2     # args.leaky_relu

# CLIP preprocessing constants (self.normalize in ClipVisionModel)
CLIP_MEAN = (0.48145466, 0.4578275, 0.40821073)
CLIP_STD = (0.26862954, 0.26130258, 0.27577711)


def _round_up(n, m):
    return (n + m - 1) // m * m


# ---------------------------------------------------------------------------
# ClipVisionModel.forward pieces (normalize -> [backbone] -> optional F.normalize)
# ---------------------------------------------------------------------------

def _clip_normalize_kernel(x_ref, mean_ref, inv_std_ref, o_ref):
    # rows = (batch, channel) pairs, lanes = pixels; pure VPU elementwise
    o_ref[...] = (x_ref[...] - mean_ref[...]) * inv_std_ref[...]


def clip_input_normalize(vision, mean=CLIP_MEAN, std=CLIP_STD):
    """self.normalize(vision): per-channel (x - mean) / std for NCHW images."""
    B, C, H, W = vision.shape
    x2 = vision.astype(jnp.float32).reshape(B * C, H * W)          # free contiguous reshape
    mean_rows = jnp.broadcast_to(
        jnp.asarray(mean, jnp.float32)[None, :], (B, C)).reshape(B * C, 1)
    inv_std_rows = jnp.broadcast_to(
        1.0 / jnp.asarray(std, jnp.float32)[None, :], (B, C)).reshape(B * C, 1)
    out = pl.pallas_call(
        _clip_normalize_kernel,
        out_shape=jax.ShapeDtypeStruct(x2.shape, jnp.float32),
    )(x2, mean_rows, inv_std_rows)
    return out.reshape(B, C, H, W)


def _l2_normalize_kernel(x_ref, o_ref):
    # F.normalize(x, dim=-1): x / max(||x||_2, 1e-12), row-wise
    x = x_ref[...]
    norm = jnp.sqrt(jnp.sum(x * x, axis=-1, keepdims=True))
    o_ref[...] = x * (1.0 / jnp.maximum(norm, 1e-12))


def l2_normalize(embedding):
    return pl.pallas_call(
        _l2_normalize_kernel,
        out_shape=jax.ShapeDtypeStruct(embedding.shape, embedding.dtype),
    )(embedding)


def clip_vision_model_forward(vision, backbone_fn, mean=CLIP_MEAN, std=CLIP_STD,
                              output_normalize=False):
    """Mirrors ClipVisionModel.forward(vision, output_normalize)."""
    if mean is not None:
        vision = clip_input_normalize(vision, mean, std)             # Pallas kernel
    # TODO(synk): self.model (CLIP vision backbone, e.g. a ViT image encoder) is an
    #             external opaque module in the spec; backbone_fn is a stand-in.
    embedding = backbone_fn(vision)
    if output_normalize:
        embedding = l2_normalize(embedding)                          # Pallas kernel
    return embedding


# ---------------------------------------------------------------------------
# Fused MLP discriminator head (the reviewed kernel), feedback applied.
# ---------------------------------------------------------------------------

def _leaky_relu_bf16(h, slope):
    # compare/select in f32 (v5e has no bf16 VALU path), then cast for the next MXU dot
    return jnp.where(h > 0, h, slope * h).astype(jnp.bfloat16)


def _mlp_disc_kernel(xy_ref, w1_ref, b1_ref, w2_ref, b2_ref, w3p_ref, b3_ref, o_ref,
                     *, slope):
    # f32 activations read straight from HBM, cast to bf16 in-register (no wrapper cast)
    xy = xy_ref[...].astype(jnp.bfloat16)
    # layer 1: single packed GEMM over the concatenated features (one K group)
    h = jnp.dot(xy, w1_ref[...], preferred_element_type=jnp.float32)
    h = _leaky_relu_bf16(h + b1_ref[...], slope)       # bias + LeakyReLU + cast fused
    # layer 2
    h = jnp.dot(h, w2_ref[...], preferred_element_type=jnp.float32)
    h = _leaky_relu_bf16(h + b2_ref[...], slope)
    # layer 3 on the MXU against the zero-padded [512,128] w3 block: no in-kernel
    # transpose; lane-dense (tb,128) output block, column 0 holds the logit.
    out = jnp.dot(h, w3p_ref[...], preferred_element_type=jnp.float32) + b3_ref[0, 0]
    o_ref[...] = out.astype(o_ref.dtype)


def _pick_batch_tile(B):
    # Multiple of 256 so each LHS pass fills the 256-wide v6e/v7x MXU; large batches
    # get 512/1024-row tiles so the per-step GEMM work dwarfs the ~0.35us per-step
    # pipeline overhead (sweep 512..1024 per chip).
    if B <= 512:
        return _round_up(max(B, 1), 256)
    if B <= 4096:
        return 512
    return 1024


def _vmem_limit_bytes(tb, d_in):
    # tb-dependent working set (no artificial floor); inputs/outputs/weights are
    # double-buffered by the BlockSpec pipeline, so count them twice.
    w_bytes = (d_in * HIDDEN * 2            # W1 bf16
               + HIDDEN * HIDDEN * 2        # W2 bf16
               + HIDDEN * W3_PAD * 2        # padded W3 bf16
               + 2 * HIDDEN * 4)            # b1, b2 f32
    in_bytes = tb * d_in * 4                # xy tile (f32)
    out_bytes = tb * W3_PAD * 4             # (tb, 128) f32 output block
    tmp_bytes = 8 * tb * HIDDEN * 4         # h1/h2 f32 + bf16 copies + slack
    budget = 2 * (w_bytes + in_bytes + out_bytes) + tmp_bytes + (8 << 20)
    return int(min(60 << 20, budget))       # stay under v7x's 64 MiB physical VMEM


def mlp_discriminator(x, y, params, *, slope=LEAKY_SLOPE, tb=None):
    """x: [B, x_dim] (vision embedding), y: [B, y_dim] (text embedding) -> [B, 1]."""
    B = x.shape[0]
    assert y.shape[0] == B
    w1, b1, w2, b2, w3p, b3 = params
    d_in = w1.shape[0]

    # torch forward concatenates (x, y).  For very large feature dims a split-weight
    # two-dot formulation avoids this extra wrapper pass over the activations.
    xy = jnp.concatenate([x, y], axis=1)
    assert xy.shape[1] == d_in

    if tb is None:
        tb = _pick_batch_tile(B)
    assert tb % 256 == 0, "tb must be a multiple of 256 (fills the 256-wide MXU)"

    B_pad = _round_up(B, tb)
    grid = B_pad // tb
    if grid > 1 and grid % 2 == 1:
        # keep the grid even so the "parallel" batch axis splits evenly across v7x's
        # two TensorCores (costs nothing vs. the odd, imbalanced grid).
        grid += 1
        B_pad += tb
    if B_pad != B:
        xy = jnp.pad(xy, ((0, B_pad - B), (0, 0)))

    kernel = functools.partial(_mlp_disc_kernel, slope=slope)

    out = pl.pallas_call(
        kernel,
        out_shape=jax.ShapeDtypeStruct((B_pad, W3_PAD), jnp.float32),
        grid_spec=pltpu.PrefetchScalarGridSpec(
            num_scalar_prefetch=0,
            grid=(grid,),
            in_specs=[
                pl.BlockSpec((tb, d_in), lambda i: (i, 0)),          # xy tile (f32)
                # weights/biases: constant block index -> fetched once, stay resident.
                # (pl.Buffered(1) single-buffering skipped for lowering portability;
                #  the VMEM budget accounts for the duplicate buffers.)
                pl.BlockSpec((d_in, HIDDEN), lambda i: (0, 0)),      # W1 (bf16)
                pl.BlockSpec((1, HIDDEN), lambda i: (0, 0)),         # b1 (f32)
                pl.BlockSpec((HIDDEN, HIDDEN), lambda i: (0, 0)),    # W2 (bf16)
                pl.BlockSpec((1, HIDDEN), lambda i: (0, 0)),         # b2 (f32)
                pl.BlockSpec((HIDDEN, W3_PAD), lambda i: (0, 0)),    # padded W3 (bf16)
                pl.BlockSpec(memory_space=pltpu.MemorySpace.SMEM),   # b3 scalar
            ],
            out_specs=pl.BlockSpec((tb, W3_PAD), lambda i: (i, 0)),
        ),
        compiler_params=pltpu.CompilerParams(
            dimension_semantics=("parallel",),
            vmem_limit_bytes=_vmem_limit_bytes(tb, d_in)),
    )(xy, w1, b1, w2, b2, w3p, b3)

    # column 0 of the lane-dense (tb, 128) blocks holds the logit
    return out[:B, 0:1]


def init_params(key, x_dim, y_dim):
    """nn.Linear-style U(-1/sqrt(fan_in), 1/sqrt(fan_in)) init.
    Weights are stored transposed ([in, out]) in bf16 for the MXU; w3 is zero-padded to a
    [HIDDEN, 128] block so layer 3 also runs on the MXU (no in-kernel transpose)."""
    d = x_dim + y_dim
    ks = jax.random.split(key, 6)

    def unif(k, shape, bound):
        return jax.random.uniform(k, shape, jnp.float32, -bound, bound)

    b = 1.0 / (d ** 0.5)
    w1 = unif(ks[0], (d, HIDDEN), b).astype(jnp.bfloat16)
    b1 = unif(ks[1], (1, HIDDEN), b)

    b = 1.0 / (HIDDEN ** 0.5)
    w2 = unif(ks[2], (HIDDEN, HIDDEN), b).astype(jnp.bfloat16)
    b2 = unif(ks[3], (1, HIDDEN), b)
    w3 = unif(ks[4], (HIDDEN, 1), b).astype(jnp.bfloat16)
    w3p = jnp.zeros((HIDDEN, W3_PAD), jnp.bfloat16).at[:, 0:1].set(w3)
    b3 = unif(ks[5], (1, 1), b)                 # f32 scalar, passed via SMEM
    return (w1, b1, w2, b2, w3p, b3)


if __name__ == "__main__":
    key = jax.random.PRNGKey(0)
    k_img, k_proj, k_txt, k_disc = jax.random.split(key, 4)

    # ---- ClipVisionModel.forward(vision, output_normalize=True) ----
    B, C, H, W = 4, 3, 16, 16
    D_EMB = 32
    vision = jax.random.uniform(k_img, (B, C, H, W), jnp.float32)     # image in [0, 1]

    # plain-JAX stand-in for the opaque CLIP backbone (self.model); NOT a Pallas kernel.
    proj = jax.random.normal(k_proj, (C * H * W, D_EMB), jnp.float32) / float(C * H * W) ** 0.5
    backbone_fn = lambda v: v.reshape(v.shape[0], -1) @ proj

    emb = clip_vision_model_forward(vision, backbone_fn, output_normalize=True)
    emb = jax.block_until_ready(emb)

    mean = jnp.asarray(CLIP_MEAN, jnp.float32)[None, :, None, None]
    inv_std = 1.0 / jnp.asarray(CLIP_STD, jnp.float32)[None, :, None, None]
    e_ref = backbone_fn((vision - mean) * inv_std)
    e_ref = e_ref / jnp.maximum(jnp.linalg.norm(e_ref, axis=-1, keepdims=True), 1e-12)
    assert emb.shape == (B, D_EMB)
    assert bool(jnp.allclose(emb, e_ref, atol=1e-4, rtol=1e-4))

    # ---- fused MLP discriminator head on (vision embedding, text embedding) ----
    x = emb                                                        # [B, 32]
    y = jax.random.normal(k_txt, (B, D_EMB), jnp.float32)          # text-embedding stand-in
    params = init_params(k_disc, D_EMB, D_EMB)
    logits = mlp_discriminator(x, y, params)
    logits = jax.block_until_ready(logits)

    # pure-JAX reference mirroring the kernel precision (bf16 MXU operands, f32 accum)
    w1, b1, w2, b2, w3p, b3 = params
    xy_ref = jnp.concatenate([x, y], axis=1).astype(jnp.bfloat16)
    h = jnp.dot(xy_ref, w1, preferred_element_type=jnp.float32) + b1
    h = jnp.where(h > 0, h, LEAKY_SLOPE * h)
    h = jnp.dot(h.astype(jnp.bfloat16), w2, preferred_element_type=jnp.float32) + b2
    h = jnp.where(h > 0, h, LEAKY_SLOPE * h)
    ref = jnp.dot(h.astype(jnp.bfloat16), w3p, preferred_element_type=jnp.float32)[:, 0:1] + b3
    assert logits.shape == (B, 1)
    assert bool(jnp.allclose(logits, ref, atol=1e-2, rtol=1e-2))

    print("KERNEL_OK")
</pallas_src>

<mosaic_0001>
module attributes {stable_mosaic.version = 11 : i64} {
  func.func @_clip_normalize_kernel(%arg0: memref<12x256xf32, #tpu.memory_space<vmem>>, %arg1: memref<12x1xf32, #tpu.memory_space<vmem>>, %arg2: memref<12x1xf32, #tpu.memory_space<vmem>>, %arg3: memref<12x256xf32, #tpu.memory_space<vmem>>) attributes {dimension_semantics = [], scalar_prefetch = 0 : i64, scratch_operands = 0 : i64, tpu.core_type = #tpu.core_type<tc>} {
    %c0 = arith.constant 0 : index
    %c0_0 = arith.constant 0 : index
    %0 = vector.load %arg0[%c0, %c0_0] : memref<12x256xf32, #tpu.memory_space<vmem>>, vector<12x256xf32>
    %c0_1 = arith.constant 0 : index
    %c0_2 = arith.constant 0 : index
    %1 = vector.load %arg1[%c0_1, %c0_2] : memref<12x1xf32, #tpu.memory_space<vmem>>, vector<12x1xf32>
    %2 = vector.broadcast %1 : vector<12x1xf32> to vector<12x256xf32>
    %3 = arith.subf %0, %2 : vector<12x256xf32>
    %c0_3 = arith.constant 0 : index
    %c0_4 = arith.constant 0 : index
    %4 = vector.load %arg2[%c0_3, %c0_4] : memref<12x1xf32, #tpu.memory_space<vmem>>, vector<12x1xf32>
    %5 = vector.broadcast %4 : vector<12x1xf32> to vector<12x256xf32>
    %6 = arith.mulf %3, %5 : vector<12x256xf32>
    %c0_5 = arith.constant 0 : index
    %c0_6 = arith.constant 0 : index
    %7 = vector.load %arg3[%c0_5, %c0_6] : memref<12x256xf32, #tpu.memory_space<vmem>>, vector<12x256xf32>
    tpu.vector_store %arg3[%c0_5, %c0_6], %6 {strides = array<i32>} : memref<12x256xf32, #tpu.memory_space<vmem>>, vector<12x256xf32>,
    return
  }
}

</mosaic_0001>

<llo_original>
// kernel: tpu_custom_call.1
$region0: #{tpu_custom_call.1}
  #allocation0 [shape = 'u32[]', space=smem, size = 0x4, offset = 0x4, fixed_abs, tag = 'smem constant byte address 0x4 - core index']
  #allocation1 [shape = 'u32[144,128]{1,0:T(1,128)}', space=vmem, size = 0x12000, scoped, tag = 'internal scratch']
  %s0 = inlined_call_operand.vmem [shape: f32[12,256], index: 0, kind: input, shape index: {}]
  %s1 = inlined_call_operand.vmem [shape: f32[12,1], index: 1, kind: input, shape index: {}]
  %s2 = inlined_call_operand.vmem [shape: f32[12,1], index: 2, kind: input, shape index: {}]
  %s3 = inlined_call_operand.hbm [shape: f32[12,256], index: 3, kind: output, shape index: {}]
  %s4 = sld [smem:[#allocation0]]
  $region22: #{tpu_custom_call.1} parent=0
    _
  %s6 = ssub.s32 1, %s4
  %s7 = scalar_select 0, %s6, %s4
  $region1: #{tpu_custom_call.1} parent=0
    #allocation2 [shape = 'u8[16384]{0}', space=vmem, size = 0x4000, scoped, tag = 'output window, operand 0, single buffered']
    #allocation3 [shape = 's32[1]{0}', space=sflag, size = 0x4, scoped, tag = 'scoped memory for tpu_custom_call.1']
    %8 = vsyncpa [#allocation3], 0
    // Predicated region
    $region2: #{tpu_custom_call.1} parent=1 // pred_check
      _
    $region3: #{tpu_custom_call.1} parent=1 // pred_check_branch
      %10 = sbr.rel (0) target = $region5
    $region4: #{tpu_custom_call.1} parent=1 // pred_region
      _
    $region5: #{tpu_custom_call.1} parent=1 // pred_fallthru
      _
    // Predicated region
    $region6: #{tpu_custom_call.1} parent=1 // pred_check
      _
    $region7: #{tpu_custom_call.1} parent=1 // pred_check_branch
      %12 = sbr.rel (0) target = $region9
    $region8: #{tpu_custom_call.1} parent=1 // pred_region
      _
    $region9: #{tpu_custom_call.1} parent=1 // pred_fallthru
      _
    // Predicated region
    $region10: #{tpu_custom_call.1} parent=1 // pred_check
      _
    $region11: #{tpu_custom_call.1} parent=1 // pred_check_branch
      %14 = sbr.rel (0) target = $region13
    $region12: #{tpu_custom_call.1} parent=1 // pred_region
      _
    $region13: #{tpu_custom_call.1} parent=1 // pred_fallthru
      _
    %v15 = vld [vmem:[%s0] sm:$0xff]
    %v16 = vld [vmem:[%s0 + $0x8] sm:$0xff]
    %v17 = vld [vmem:[%s0 + $0x10] sm:$0xf]
    %v18 = vld [vmem:[%s0 + $0x18] sm:$0xf]
    %v19 = vld [vmem:[%s1] sm:$0xff]
    %v20 = vld [vmem:[%s1 + $0x8] sm:$0xf]
    %22 = vset.pattern.permute.xlu0 0
    %23 = vperm.xlu0 %22, %v19
    %v24 = vpop.permute.xlu0 %23
    %27 = vset.pattern.permute.xlu0 0
    %28 = vperm.xlu0 %27, %v20
    %v29 = vpop.permute.xlu0 %28
    %v31 = vsub.f32 %v15, %v24
    %v32 = vsub.f32 %v16, %v24
    %v33 = vsub.f32 %v17, %v29
    %v34 = vsub.f32 %v18, %v29
    %v35 = vld [vmem:[%s2] sm:$0xff]
    %v36 = vld [vmem:[%s2 + $0x8] sm:$0xf]
    %38 = vset.pattern.permute.xlu0 0
    %39 = vperm.xlu0 %38, %v35
    %v40 = vpop.permute.xlu0 %39
    %43 = vset.pattern.permute.xlu0 0
    %44 = vperm.xlu0 %43, %v36
    %v45 = vpop.permute.xlu0 %44
    %v47 = vmul.f32 %v31, %v40
    %v48 = vmul.f32 %v32, %v40
    %v49 = vmul.f32 %v33, %v45
    %v50 = vmul.f32 %v34, %v45
    %51 = vst [vmem:[#allocation2] sm:$0xff] %v47
    %52 = vst [vmem:[#allocation2 + $0x8] sm:$0xff] %v48
    %53 = vst [vmem:[#allocation2 + $0x10] sm:$0xf] %v49
    %54 = vst [vmem:[#allocation2 + $0x18] sm:$0xf] %v50
    // Predicated region
    $region14: #{tpu_custom_call.1} parent=1 // pred_check
      _
    $region15: #{tpu_custom_call.1} parent=1 // pred_check_branch
      %56 = sbr.rel (0) target = $region17
    $region16: #{tpu_custom_call.1} parent=1 // pred_region
      %s58 = ssub.s32 512, 512
      %59 = vsyncadd [#allocation3], %s58
      %s60 = sshll.u32 [#allocation2], 4
      %s61 = int_to_ptr.vmem [resolvable:$true] %s60
      %66 = dma.vmem_to_hbm [thread:$0]  %s61, 512, %s3, [#allocation3], 256, 256, 16
    $region17: #{tpu_custom_call.1} parent=1 // pred_fallthru
      _
    // Predicated region
    $region18: #{tpu_custom_call.1} parent=1 // pred_check
      _
    $region19: #{tpu_custom_call.1} parent=1 // pred_check_branch
      %68 = sbr.rel (0) target = $region21
    $region20: #{tpu_custom_call.1} parent=1 // pred_region
      %69 = dma.done [#allocation3], 512
    $region21: #{tpu_custom_call.1} parent=1 // pred_fallthru
      _
    %70 = vsyncpa [#allocation3], 1

</llo_original>
